<compile_context>
chip_gen: v6e
topology: v6e:2x2x1
jax: 0.10.0
libtpu: 0.0.40
codegen_flags: <defaults>
</compile_context>

<pallas_src>
import functools
import math

import jax
import jax.numpy as jnp
from jax import lax
from jax.experimental import pallas as pl
from jax.experimental.pallas import tpu as pltpu


# Above v5e (16 MiB) / v6e (32 MiB) scoped defaults, below v7x physical 64 MiB.
_VMEM_LIMIT = 48 * 1024 * 1024


def _round_up(n, m):
    return ((n + m - 1) // m) * m


# ---------------------------------------------------------------------------
# Pallas kernels
# ---------------------------------------------------------------------------

def _embed_kernel(patch_ref, convw_ref, clspos_ref, g_ref, b_ref, o_ref, *, eps):
    """Patch-embed matmul + (cls token + positional embedding) add + ln_pre.
    The cls token is handled by a zero patch row 0 plus a fused
    (class_emb + pos_emb) additive table, so no in-kernel concatenation.
    Padded token rows (row >= real_T) carry zeros and are masked later."""
    Bt, T, Cpp = patch_ref.shape
    D = convw_ref.shape[1]
    pt = patch_ref[...].reshape(Bt * T, Cpp).astype(jnp.bfloat16)
    h = jnp.dot(pt, convw_ref[...], preferred_element_type=jnp.float32)
    h = h.reshape(Bt, T, D) + clspos_ref[...]                      # (Bt,T,D)
    mu = jnp.mean(h, axis=-1, keepdims=True)
    var = jnp.mean(jnp.square(h - mu), axis=-1, keepdims=True)
    y = (h - mu) * lax.rsqrt(var + eps)
    o_ref[...] = (y * g_ref[...] + b_ref[...]).astype(o_ref.dtype)


def _transformer_kernel(x_ref, mask_ref, ln1g_ref, ln1b_ref,
                        wqkv_ref, bqkv_ref, wo_ref, bo_ref,
                        ln2g_ref, ln2b_ref,
                        wfc_ref, bfc_ref, wpj_ref, bpj_ref,
                        o_ref, attn_sc, *, n_heads, eps):
    """One grid step = (batch block b, layer l).  All layers of the encoder run
    in this single pallas_call; the output block (same index across the layer
    axis) stays resident in VMEM and carries the running activations, so there
    are no HBM round trips between LN / QKV / attention / out-proj / MLP or
    between layers.  bf16 matmul inputs, f32 accumulation; LN / softmax /
    QuickGELU in f32.  mask_ref is a precomputed (T,T) additive attention bias
    (key-padding mask for the ViT, causal mask for the text encoder)."""
    layer = pl.program_id(1)

    @pl.when(layer == 0)
    def _():
        o_ref[...] = x_ref[...]

    Bt, T, D = o_ref.shape
    hd = D // n_heads
    scale = 1.0 / math.sqrt(hd)

    x = o_ref[...].astype(jnp.float32).reshape(Bt * T, D)   # running activations

    def layernorm(z, g, b):
        mu = jnp.mean(z, axis=-1, keepdims=True)
        var = jnp.mean(jnp.square(z - mu), axis=-1, keepdims=True)
        return (z - mu) * lax.rsqrt(var + eps) * g + b

    # ---------------- multi-head self-attention ----------------
    h = layernorm(x, ln1g_ref[0], ln1b_ref[0]).astype(jnp.bfloat16)
    # Fused QKV: one lane-dense (Bt*T, D) @ (D, 3D) matmul.
    qkv = jnp.dot(h, wqkv_ref[0], preferred_element_type=jnp.float32) + bqkv_ref[0]

    mask = mask_ref[...]                                     # (T, T) additive bias

    # TODO(synk): at real CLIP head counts (H=12/16) convert this static unroll
    # to lax.fori_loop (still writing into attn_sc) to bound vreg live ranges.
    for hh in range(n_heads):
        q = qkv[:, hh * hd:(hh + 1) * hd].reshape(Bt, T, hd)
        k = qkv[:, D + hh * hd:D + (hh + 1) * hd].reshape(Bt, T, hd)
        v = qkv[:, 2 * D + hh * hd:2 * D + (hh + 1) * hd].reshape(Bt, T, hd)
        s = jnp.einsum('bqd,bkd->bqk', q.astype(jnp.bfloat16), k.astype(jnp.bfloat16),
                       preferred_element_type=jnp.float32) * scale
        s = s + mask
        s = s - jnp.max(s, axis=-1, keepdims=True)
        p = jnp.exp(s)
        p = p * pl.reciprocal(jnp.sum(p, axis=-1, keepdims=True), approx=True)
        o_h = jnp.einsum('bqk,bkd->bqd', p.astype(jnp.bfloat16), v.astype(jnp.bfloat16),
                         preferred_element_type=jnp.float32)            # (Bt,T,hd)
        # write this head's output into its hd-wide lane slot of the scratch
        attn_sc[:, hh * hd:(hh + 1) * hd] = o_h.reshape(Bt * T, hd)

    # Out-projection: single full-depth (K=D) matmul against the fused weight.
    attn = jnp.dot(attn_sc[...].astype(jnp.bfloat16), wo_ref[0],
                   preferred_element_type=jnp.float32) + bo_ref[0]
    x = x + attn

    # ---------------- MLP with QuickGELU ----------------
    h2 = layernorm(x, ln2g_ref[0], ln2b_ref[0]).astype(jnp.bfloat16)
    m = jnp.dot(h2, wfc_ref[0], preferred_element_type=jnp.float32) + bfc_ref[0]
    m = m * jax.nn.sigmoid(1.702 * m)
    m = jnp.dot(m.astype(jnp.bfloat16), wpj_ref[0],
                preferred_element_type=jnp.float32) + bpj_ref[0]
    x = x + m

    o_ref[...] = x.reshape(Bt, T, D).astype(o_ref.dtype)


def _head_kernel(x_ref, g_ref, b_ref, w_ref, o_ref, *, eps, l2_normalize):
    """LayerNorm + projection (+ optional L2 normalization)."""
    x = x_ref[...].astype(jnp.float32)               # (R, D)
    mu = jnp.mean(x, axis=-1, keepdims=True)
    var = jnp.mean(jnp.square(x - mu), axis=-1, keepdims=True)
    y = (x - mu) * lax.rsqrt(var + eps) * g_ref[...] + b_ref[...]
    out = jnp.dot(y.astype(jnp.bfloat16), w_ref[...],
                  preferred_element_type=jnp.float32)               # (R, E)
    if l2_normalize:
        out = out * lax.rsqrt(jnp.sum(out * out, axis=-1, keepdims=True) + 1e-12)
    o_ref[...] = out.astype(o_ref.dtype)


def _logits_kernel(scale_ref, img_ref, key_ref, o_ref):
    """get_clip_logits: normalize(image_features) @ keys^T * exp(logit_scale).
    keys come in already L2-normalized; exp(logit_scale) is an SMEM scalar."""
    f = img_ref[...]
    f = f * lax.rsqrt(jnp.sum(f * f, axis=-1, keepdims=True) + 1e-12)
    logits = lax.dot_general(f.astype(jnp.bfloat16), key_ref[...].astype(jnp.bfloat16),
                             (((1,), (1,)), ((), ())),
                             preferred_element_type=jnp.float32)
    o_ref[...] = (logits * scale_ref[0, 0]).astype(o_ref.dtype)


# ---------------------------------------------------------------------------
# Kernel wrappers
# ---------------------------------------------------------------------------

def pallas_embed(patches, vp, *, block_batch=None):
    """patches: (B, T, C*p*p); token row 0 is the (zero) cls slot, rows past
    the real token count are zero padding."""
    B, T, Cpp = patches.shape
    D = vp["conv_w"].shape[1]
    Bt = B if block_batch is None else max(1, min(block_batch, B))
    Bp = _round_up(B, Bt)
    if Bp != B:
        patches = jnp.pad(patches, ((0, Bp - B), (0, 0), (0, 0)))
    out = pl.pallas_call(
        functools.partial(_embed_kernel, eps=1e-5),
        out_shape=jax.ShapeDtypeStruct((Bp, T, D), jnp.float32),
        grid=(Bp // Bt,),
        in_specs=[
            pl.BlockSpec((Bt, T, Cpp), lambda b: (b, 0, 0)),
            pl.BlockSpec((Cpp, D), lambda b: (0, 0)),
            pl.BlockSpec((T, D), lambda b: (0, 0)),
            pl.BlockSpec((1, D), lambda b: (0, 0)),
            pl.BlockSpec((1, D), lambda b: (0, 0)),
        ],
        out_specs=pl.BlockSpec((Bt, T, D), lambda b: (b, 0, 0)),
        compiler_params=pltpu.CompilerParams(
            dimension_semantics=("parallel",),
            vmem_limit_bytes=_VMEM_LIMIT),
    )(patches.astype(jnp.bfloat16), vp["conv_w"], vp["clspos"],
      vp["ln_pre_g"], vp["ln_pre_b"])
    return out[:B]


def _stacked_spec(arr):
    """BlockSpec selecting layer `l` from a (L, ...)-stacked parameter."""
    nd = arr.ndim
    return pl.BlockSpec((1,) + tuple(arr.shape[1:]),
                        lambda b, l, _n=nd: (l,) + (0,) * (_n - 1))


def pallas_transformer(x, attn_bias, blocks, n_heads, *, block_batch=None):
    """Run ALL transformer layers of one encoder in a single pallas_call.
    Batch is folded into the block shape (Bt, T, D) so layer weights are only
    DMA'd once per batch-block (on v7x pass block_batch=B//2 to feed both TCs)."""
    B, T, D = x.shape
    L = blocks["w_qkv"].shape[0]
    Bt = B if block_batch is None else max(1, min(block_batch, B))
    Bp = _round_up(B, Bt)
    if Bp != B:
        x = jnp.pad(x, ((0, Bp - B), (0, 0), (0, 0)))
    out = pl.pallas_call(
        functools.partial(_transformer_kernel, n_heads=n_heads, eps=1e-5),
        out_shape=jax.ShapeDtypeStruct((Bp, T, D), jnp.float32),
        grid=(Bp // Bt, L),
        in_specs=[
            pl.BlockSpec((Bt, T, D), lambda b, l: (b, 0, 0)),
            pl.BlockSpec((T, T), lambda b, l: (0, 0)),
            _stacked_spec(blocks["ln1_g"]), _stacked_spec(blocks["ln1_b"]),
            _stacked_spec(blocks["w_qkv"]), _stacked_spec(blocks["b_qkv"]),
            _stacked_spec(blocks["w_out"]), _stacked_spec(blocks["b_out"]),
            _stacked_spec(blocks["ln2_g"]), _stacked_spec(blocks["ln2_b"]),
            _stacked_spec(blocks["w_fc"]), _stacked_spec(blocks["b_fc"]),
            _stacked_spec(blocks["w_proj"]), _stacked_spec(blocks["b_proj"]),
        ],
        out_specs=pl.BlockSpec((Bt, T, D), lambda b, l: (b, 0, 0)),
        scratch_shapes=[pltpu.VMEM((Bt * T, D), jnp.float32)],
        compiler_params=pltpu.CompilerParams(
            dimension_semantics=("parallel", "arbitrary"),
            vmem_limit_bytes=_VMEM_LIMIT),
    )(x, attn_bias,
      blocks["ln1_g"], blocks["ln1_b"],
      blocks["w_qkv"], blocks["b_qkv"],
      blocks["w_out"], blocks["b_out"],
      blocks["ln2_g"], blocks["ln2_b"],
      blocks["w_fc"], blocks["b_fc"],
      blocks["w_proj"], blocks["b_proj"])
    return out[:B]


def pallas_head(x, gamma, beta, w, l2_normalize):
    R, D = x.shape
    E = w.shape[1]
    return pl.pallas_call(
        functools.partial(_head_kernel, eps=1e-5, l2_normalize=l2_normalize),
        out_shape=jax.ShapeDtypeStruct((R, E), jnp.float32),
    )(x.astype(jnp.float32), gamma.reshape(1, -1), beta.reshape(1, -1), w)


def pallas_clip_logits(image_features, keys, logit_scale):
    B = image_features.shape[0]
    C = keys.shape[0]
    scale = jnp.exp(jnp.asarray(logit_scale, jnp.float32)).reshape(1, 1)
    return pl.pallas_call(
        _logits_kernel,
        out_shape=jax.ShapeDtypeStruct((B, C), jnp.float32),
        in_specs=[
            pl.BlockSpec(memory_space=pltpu.MemorySpace.SMEM),
            pl.BlockSpec(memory_space=pltpu.MemorySpace.VMEM),
            pl.BlockSpec(memory_space=pltpu.MemorySpace.VMEM),
        ],
        out_specs=pl.BlockSpec(memory_space=pltpu.MemorySpace.VMEM),
    )(scale, image_features.astype(jnp.float32), keys.astype(jnp.float32))


# ---------------------------------------------------------------------------
# CLIP-style model (visual ViT + text transformer), built from the kernels
# ---------------------------------------------------------------------------

def encode_image(x, vp, n_heads):
    """CLIP ViT: patch-conv (as im2col matmul) + cls tok + pos emb + ln_pre
    (one fused kernel) -> fused transformer -> ln_post(cls) @ proj."""
    B, C, H, W = x.shape
    p = vp["patch_size"]
    gh, gw = H // p, W // p
    patches = x.reshape(B, C, gh, p, gw, p).transpose(0, 2, 4, 1, 3, 5)
    patches = patches.reshape(B, gh * gw, C * p * p)
    T_pad = vp["seq_len"]
    # Row 0 of the token axis is the CLS slot (zero patch; its embedding is
    # supplied by the fused class_emb+pos_emb table).  Trailing rows pad the
    # token axis to a multiple of 8; they are masked out of the attention by
    # the precomputed additive bias vp["attn_bias"].
    patches = jnp.pad(patches, ((0, 0), (1, T_pad - 1 - gh * gw), (0, 0)))
    h = pallas_embed(patches, vp)                               # (B, T_pad, D)
    h = pallas_transformer(h, vp["attn_bias"], vp["blocks"], n_heads)
    cls_out = h[:, 0, :]
    return pallas_head(cls_out, vp["ln_post_g"], vp["ln_post_b"],
                       vp["proj"], l2_normalize=False)


def compute_keys(params, start, end, n_heads):
    """Prompter.compute_keys: prompts = [prefix, ctx, suffix] -> TextEncoder
    (pos emb, causal transformer, ln_final, EOT gather, text_projection),
    then F.normalize (fused into the text head kernel)."""
    tp = params["text"]
    prefix = params["token_prefix"][start:end]
    ctx = params["prompt_parameters"][start:end]
    suffix = params["token_suffix"][start:end]
    prompts = jnp.concatenate([prefix, ctx, suffix], axis=1)    # (n, Lr, D)
    tokenized = params["tokenized_prompts"][start:end]

    n, Lr, D = prompts.shape
    Lp = tp["seq_len"]
    x = prompts + tp["pos_emb"][None, :Lr]                      # tiny JAX glue
    if Lp != Lr:                                                # pad seq to x8
        x = jnp.pad(x, ((0, 0), (0, Lp - Lr), (0, 0)))
    x = pallas_transformer(x, tp["attn_bias"], tp["blocks"], n_heads)
    eot = jnp.argmax(tokenized, axis=-1)
    x_eot = x[jnp.arange(n), eot]                               # (n, D) gather
    # LN is row-wise, so gather-then-LN == LN-then-gather (reference order).
    keys = pallas_head(x_eot, tp["ln_final_g"], tp["ln_final_b"],
                       tp["text_projection"], l2_normalize=True)
    return keys


def model_forward(params, x, cur_classes, return_query=False,
                  frozen_past_classes=0):
    clip_out = encode_image(x, params["visual"], params["n_heads"])
    if return_query:
        return clip_out
    # frozen_past_classes only controls gradient detaching in the reference;
    # forward values are identical, so a single compute_keys(0, cur_classes)
    # reproduces the output exactly.
    keys = compute_keys(params, 0, cur_classes, params["n_heads"])
    return pallas_clip_logits(clip_out, keys, params["logit_scale"])


# ---------------------------------------------------------------------------
# Deterministic parameter construction
# ---------------------------------------------------------------------------

def make_blocks(key, n_layers, d, n_heads, std=0.02):
    """All layers stacked along a leading L axis; QKV fused to one (D, 3D)
    weight and the out-proj kept as a full (D, D) weight so the kernel issues
    lane-dense, full-depth matmuls.  Matmul weights in bf16."""
    kqkv, ko, kf, kp = jax.random.split(key, 4)
    L = n_layers

    def nrm(k, shape):
        return (std * jax.random.normal(k, shape, jnp.float32)).astype(jnp.bfloat16)

    return dict(
        ln1_g=jnp.ones((L, 1, d), jnp.float32),
        ln1_b=jnp.zeros((L, 1, d), jnp.float32),
        w_qkv=nrm(kqkv, (L, d, 3 * d)),
        b_qkv=jnp.zeros((L, 1, 3 * d), jnp.float32),
        w_out=nrm(ko, (L, d, d)),
        b_out=jnp.zeros((L, 1, d), jnp.float32),
        ln2_g=jnp.ones((L, 1, d), jnp.float32),
        ln2_b=jnp.zeros((L, 1, d), jnp.float32),
        w_fc=nrm(kf, (L, d, 4 * d)),
        b_fc=jnp.zeros((L, 1, 4 * d), jnp.float32),
        w_proj=nrm(kp, (L, 4 * d, d)),
        b_proj=jnp.zeros((L, 1, d), jnp.float32),
    )


def init_params(key, *, num_classes=4, img=16, patch=8, in_ch=3,
                vis_width=64, txt_width=64, embed_dim=64,
                n_heads=4, n_layers=2, ctx_len=8):
    ks = jax.random.split(key, 12)

    def nrm(k, shape, std=0.02):
        return std * jax.random.normal(k, shape, jnp.float32)

    n_patches = (img // patch) ** 2
    T_real = n_patches + 1
    T_pad = _round_up(T_real, 8)                 # sublane-dense token axis
    class_emb = nrm(ks[0], (vis_width,))
    pos_emb = nrm(ks[1], (T_real, vis_width), std=0.01)
    clspos = jnp.zeros((T_pad, vis_width), jnp.float32)
    clspos = clspos.at[:T_real].set(pos_emb)
    clspos = clspos.at[0, :].add(class_emb)      # fused cls-token + pos table

    # Additive attention bias masking padded key columns (hoisted out of the
    # kernel so the (T,T) mask is not rebuilt on the VPU every grid step).
    col = jnp.arange(T_pad)[None, :]
    vis_bias = jnp.broadcast_to(
        jnp.where(col < T_real, 0.0, -1e30).astype(jnp.float32), (T_pad, T_pad))

    visual = dict(
        patch_size=patch,
        seq_len=T_pad,
        attn_bias=vis_bias,
        conv_w=nrm(ks[2], (in_ch * patch * patch, vis_width)).astype(jnp.bfloat16),
        clspos=clspos,
        ln_pre_g=jnp.ones((1, vis_width), jnp.float32),
        ln_pre_b=jnp.zeros((1, vis_width), jnp.float32),
        blocks=make_blocks(ks[3], n_layers, vis_width, n_heads),
        ln_post_g=jnp.ones((1, vis_width), jnp.float32),
        ln_post_b=jnp.zeros((1, vis_width), jnp.float32),
        proj=nrm(ks[4], (vis_width, embed_dim)).astype(jnp.bfloat16),
    )

    L_pad = _round_up(ctx_len, 8)
    row = jnp.arange(L_pad)[:, None]
    colt = jnp.arange(L_pad)[None, :]
    causal_bias = jnp.where(colt <= row, 0.0, -1e30).astype(jnp.float32)

    text = dict(
        seq_len=L_pad,
        attn_bias=causal_bias,
        pos_emb=nrm(ks[5], (ctx_len, txt_width), std=0.01),
        blocks=make_blocks(ks[6], n_layers, txt_width, n_heads),
        ln_final_g=jnp.ones((1, txt_width), jnp.float32),
        ln_final_b=jnp.zeros((1, txt_width), jnp.float32),
        text_projection=nrm(ks[7], (txt_width, embed_dim)).astype(jnp.bfloat16),
    )
    # Stand-in for clip_model.token_embedding(tokenized_prompts):
    # TODO(synk): real CLIP tokenizer / token_embedding checkpoint not loadable here.
    embedding = nrm(ks[8], (num_classes, ctx_len, txt_width))
    eot_pos = jnp.array([3 + (c % 3) for c in range(num_classes)], jnp.int32)
    tokenized = jnp.zeros((num_classes, ctx_len), jnp.int32)
    tokenized = tokenized.at[:, 0].set(49406)                        # SOS
    tokenized = tokenized.at[jnp.arange(num_classes), eot_pos].set(49407)  # EOT

    return dict(
        n_heads=n_heads,
        visual=visual,
        text=text,
        token_prefix=embedding[:, :1, :],
        token_suffix=embedding[:, 2:, :],
        prompt_parameters=nrm(ks[9], (num_classes, 1, txt_width)),
        tokenized_prompts=tokenized,
        logit_scale=float(math.log(1.0 / 0.07)),
    )


# ---------------------------------------------------------------------------

if __name__ == "__main__":
    root = jax.random.PRNGKey(0)
    k_param, k_x = jax.random.split(root)

    params = init_params(k_param, num_classes=4, img=16, patch=8, in_ch=3,
                         vis_width=64, txt_width=64, embed_dim=64,
                         n_heads=4, n_layers=2, ctx_len=8)

    x = jax.random.normal(k_x, (2, 3, 16, 16), jnp.float32)   # NCHW image batch

    logits = model_forward(params, x, cur_classes=4, frozen_past_classes=0)
    logits = jax.block_until_ready(logits)
    assert logits.shape == (2, 4), logits.shape
    assert not bool(jnp.isnan(logits).any())

    query = jax.block_until_ready(
        model_forward(params, x, cur_classes=4, return_query=True))
    assert query.shape == (2, 64), query.shape
    assert not bool(jnp.isnan(query).any())

    print("KERNEL_OK")
</pallas_src>

<mosaic_0001>
module attributes {stable_mosaic.version = 11 : i64} {
  func.func @_embed_kernel(%arg0: i32, %arg1: memref<2x8x192xbf16, #tpu.memory_space<vmem>>, %arg2: memref<192x64xbf16, #tpu.memory_space<vmem>>, %arg3: memref<8x64xf32, #tpu.memory_space<vmem>>, %arg4: memref<1x64xf32, #tpu.memory_space<vmem>>, %arg5: memref<1x64xf32, #tpu.memory_space<vmem>>, %arg6: memref<2x8x64xf32, #tpu.memory_space<vmem>>) attributes {dimension_semantics = [#tpu.dimension_semantics<parallel>], iteration_bounds = array<i64: 1>, scalar_prefetch = 0 : i64, scratch_operands = 0 : i64, tpu.core_type = #tpu.core_type<tc>, window_params = [{transform_indices = @transform_0, window_bounds = array<i64: 2, 8, 192>}, {pipeline_mode = #tpu.pipeline_mode<synchronous>, transform_indices = @transform_1, window_bounds = array<i64: 192, 64>}, {pipeline_mode = #tpu.pipeline_mode<synchronous>, transform_indices = @transform_2, window_bounds = array<i64: 8, 64>}, {pipeline_mode = #tpu.pipeline_mode<synchronous>, transform_indices = @transform_3, window_bounds = array<i64: 1, 64>}, {pipeline_mode = #tpu.pipeline_mode<synchronous>, transform_indices = @transform_4, window_bounds = array<i64: 1, 64>}, {transform_indices = @transform_5, window_bounds = array<i64: 2, 8, 64>}]} {
    %c0 = arith.constant 0 : index
    %c0_0 = arith.constant 0 : index
    %c0_1 = arith.constant 0 : index
    %0 = vector.load %arg1[%c0, %c0_0, %c0_1] : memref<2x8x192xbf16, #tpu.memory_space<vmem>>, vector<2x8x192xbf16>
    %1 = vector.shape_cast %0 : vector<2x8x192xbf16> to vector<16x192xbf16>
    %c0_2 = arith.constant 0 : index
    %c0_3 = arith.constant 0 : index
    %2 = vector.load %arg2[%c0_2, %c0_3] : memref<192x64xbf16, #tpu.memory_space<vmem>>, vector<192x64xbf16>
    %cst = arith.constant dense<0.000000e+00> : vector<16x64xf32>
    %3 = tpu.matmul %1, %2, %cst {dimension_numbers = #tpu.dot_dimension_numbers<[1], [0], [0], [1], [0, 0, 1, 1], [], []>} : vector<16x192xbf16>, vector<192x64xbf16>, vector<16x64xf32> -> vector<16x64xf32>
    %4 = vector.shape_cast %3 : vector<16x64xf32> to vector<2x8x64xf32>
    %c0_4 = arith.constant 0 : index
    %c0_5 = arith.constant 0 : index
    %5 = vector.load %arg3[%c0_4, %c0_5] : memref<8x64xf32, #tpu.memory_space<vmem>>, vector<8x64xf32>
    %6 = vector.shape_cast %5 : vector<8x64xf32> to vector<1x8x64xf32>
    %7 = vector.broadcast %6 : vector<1x8x64xf32> to vector<2x8x64xf32>
    %8 = arith.addf %4, %7 : vector<2x8x64xf32>
    %cst_6 = arith.constant dense<0.000000e+00> : vector<2x8xf32>
    %9 = vector.multi_reduction <add>, %8, %cst_6 [2] : vector<2x8x64xf32> to vector<2x8xf32>
    %10 = vector.shape_cast %9 : vector<2x8xf32> to vector<2x8x1xf32>
    %cst_7 = arith.constant 6.400000e+01 : f32
    %11 = vector.broadcast %cst_7 : f32 to vector<2x8x1xf32>
    %12 = arith.divf %10, %11 : vector<2x8x1xf32>
    %13 = vector.broadcast %12 : vector<2x8x1xf32> to vector<2x8x64xf32>
    %14 = arith.subf %8, %13 : vector<2x8x64xf32>
    %15 = arith.mulf %14, %14 : vector<2x8x64xf32>
    %cst_8 = arith.constant dense<0.000000e+00> : vector<2x8xf32>
    %16 = vector.multi_reduction <add>, %15, %cst_8 [2] : vector<2x8x64xf32> to vector<2x8xf32>
    %17 = vector.shape_cast %16 : vector<2x8xf32> to vector<2x8x1xf32>
    %cst_9 = arith.constant 6.400000e+01 : f32
    %18 = vector.broadcast %cst_9 : f32 to vector<2x8x1xf32>
    %19 = arith.divf %17, %18 : vector<2x8x1xf32>
    %20 = vector.broadcast %12 : vector<2x8x1xf32> to vector<2x8x64xf32>
    %21 = arith.subf %8, %20 : vector<2x8x64xf32>
    %cst_10 = arith.constant 9.99999974E-6 : f32
    %22 = vector.broadcast %cst_10 : f32 to vector<2x8x1xf32>
    %23 = arith.addf %19, %22 : vector<2x8x1xf32>
    %24 = math.rsqrt %23 : vector<2x8x1xf32>
    %25 = vector.broadcast %24 : vector<2x8x1xf32> to vector<2x8x64xf32>
    %26 = arith.mulf %21, %25 : vector<2x8x64xf32>
    %c0_11 = arith.constant 0 : index
    %c0_12 = arith.constant 0 : index
    %27 = vector.load %arg4[%c0_11, %c0_12] : memref<1x64xf32, #tpu.memory_space<vmem>>, vector<1x64xf32>
    %28 = vector.shape_cast %27 : vector<1x64xf32> to vector<1x1x64xf32>
    %29 = vector.broadcast %28 : vector<1x1x64xf32> to vector<2x8x64xf32>
    %30 = arith.mulf %26, %29 : vector<2x8x64xf32>
    %c0_13 = arith.constant 0 : index
    %c0_14 = arith.constant 0 : index
    %31 = vector.load %arg5[%c0_13, %c0_14] : memref<1x64xf32, #tpu.memory_space<vmem>>, vector<1x64xf32>
    %32 = vector.shape_cast %31 : vector<1x64xf32> to vector<1x1x64xf32>
    %33 = vector.broadcast %32 : vector<1x1x64xf32> to vector<2x8x64xf32>
    %34 = arith.addf %30, %33 : vector<2x8x64xf32>
    %c0_15 = arith.constant 0 : index
    %c0_16 = arith.constant 0 : index
    %c0_17 = arith.constant 0 : index
    %35 = vector.load %arg6[%c0_15, %c0_16, %c0_17] : memref<2x8x64xf32, #tpu.memory_space<vmem>>, vector<2x8x64xf32>
    tpu.vector_store %arg6[%c0_15, %c0_16, %c0_17], %34 {strides = array<i32>} : memref<2x8x64xf32, #tpu.memory_space<vmem>>, vector<2x8x64xf32>,
    return
  }
  func.func @transform_0(%arg0: i32) -> (i32, i32, i32) {
    %c0_i32 = arith.constant 0 : i32
    %c0_i32_0 = arith.constant 0 : i32
    %c0_i32_1 = arith.constant 0 : i32
    return %arg0, %c0_i32, %c0_i32_0 : i32, i32, i32
  }
  func.func @transform_1(%arg0: i32) -> (i32, i32) {
    %c0_i32 = arith.constant 0 : i32
    %c0_i32_0 = arith.constant 0 : i32
    %c0_i32_1 = arith.constant 0 : i32
    return %c0_i32, %c0_i32_0 : i32, i32
  }
  func.func @transform_2(%arg0: i32) -> (i32, i32) {
    %c0_i32 = arith.constant 0 : i32
    %c0_i32_0 = arith.constant 0 : i32
    %c0_i32_1 = arith.constant 0 : i32
    return %c0_i32, %c0_i32_0 : i32, i32
  }
  func.func @transform_3(%arg0: i32) -> (i32, i32) {
    %c0_i32 = arith.constant 0 : i32
    %c0_i32_0 = arith.constant 0 : i32
    %c0_i32_1 = arith.constant 0 : i32
    return %c0_i32, %c0_i32_0 : i32, i32
  }
  func.func @transform_4(%arg0: i32) -> (i32, i32) {
    %c0_i32 = arith.constant 0 : i32
    %c0_i32_0 = arith.constant 0 : i32
    %c0_i32_1 = arith.constant 0 : i32
    return %c0_i32, %c0_i32_0 : i32, i32
  }
  func.func @transform_5(%arg0: i32) -> (i32, i32, i32) {
    %c0_i32 = arith.constant 0 : i32
    %c0_i32_0 = arith.constant 0 : i32
    %c0_i32_1 = arith.constant 0 : i32
    return %arg0, %c0_i32, %c0_i32_0 : i32, i32, i32
  }
}

</mosaic_0001>

<llo_original>
// kernel: tpu_custom_call.1
$region0: #{tpu_custom_call.1}
  #allocation0 [shape = 'u32[]', space=smem, size = 0x4, offset = 0x4, fixed_abs, tag = 'smem constant byte address 0x4 - core index']
  #allocation1 [shape = 'u32[144,128]{1,0:T(1,128)}', space=vmem, size = 0x12000, scoped, tag = 'internal scratch']
  %s0 = inlined_call_operand.vmem [shape: bf16[2,8,192], index: 0, kind: input, shape index: {}]
  %s1 = inlined_call_operand.vmem [shape: bf16[192,64], index: 1, kind: input, shape index: {}]
  %s2 = inlined_call_operand.vmem [shape: f32[8,64], index: 2, kind: input, shape index: {}]
  %s3 = inlined_call_operand.vmem [shape: f32[1,64], index: 3, kind: input, shape index: {}]
  %s4 = inlined_call_operand.vmem [shape: f32[1,64], index: 4, kind: input, shape index: {}]
  %s5 = inlined_call_operand.hbm [shape: f32[2,8,64], index: 5, kind: output, shape index: {}]
  %s6 = sld [smem:[#allocation0]]
  $region30: #{tpu_custom_call.1} parent=0
    _
  %s8 = ssub.s32 1, %s6
  %s9 = scalar_select 0, %s8, %s6
  $region1: #{tpu_custom_call.1} parent=0
    #allocation2 [shape = 'u8[8192]{0}', space=vmem, size = 0x2000, scoped, tag = 'output window, operand 0, single buffered']
    #allocation3 [shape = 's32[1]{0}', space=sflag, size = 0x4, scoped, tag = 'scoped memory for tpu_custom_call.1']
    %10 = vsyncpa [#allocation3], 0
    // Predicated region
    $region2: #{tpu_custom_call.1} parent=1 // pred_check
      _
    $region3: #{tpu_custom_call.1} parent=1 // pred_check_branch
      %12 = sbr.rel (0) target = $region5
    $region4: #{tpu_custom_call.1} parent=1 // pred_region
      _
    $region5: #{tpu_custom_call.1} parent=1 // pred_fallthru
      _
    // Predicated region
    $region6: #{tpu_custom_call.1} parent=1 // pred_check
      _
    $region7: #{tpu_custom_call.1} parent=1 // pred_check_branch
      %14 = sbr.rel (0) target = $region9
    $region8: #{tpu_custom_call.1} parent=1 // pred_region
      _
    $region9: #{tpu_custom_call.1} parent=1 // pred_fallthru
      _
    // Predicated region
    $region10: #{tpu_custom_call.1} parent=1 // pred_check
      _
    $region11: #{tpu_custom_call.1} parent=1 // pred_check_branch
      %16 = sbr.rel (0) target = $region13
    $region12: #{tpu_custom_call.1} parent=1 // pred_region
      _
    $region13: #{tpu_custom_call.1} parent=1 // pred_fallthru
      _
    // Predicated region
    $region14: #{tpu_custom_call.1} parent=1 // pred_check
      _
    $region15: #{tpu_custom_call.1} parent=1 // pred_check_branch
      %18 = sbr.rel (0) target = $region17
    $region16: #{tpu_custom_call.1} parent=1 // pred_region
      _
    $region17: #{tpu_custom_call.1} parent=1 // pred_fallthru
      _
    // Predicated region
    $region18: #{tpu_custom_call.1} parent=1 // pred_check
      _
    $region19: #{tpu_custom_call.1} parent=1 // pred_check_branch
      %20 = sbr.rel (0) target = $region21
    $region20: #{tpu_custom_call.1} parent=1 // pred_region
      _
    $region21: #{tpu_custom_call.1} parent=1 // pred_fallthru
      _
    %v22 = vld [vmem:[%s0] sm:$0xff]
    %v23 = vld [vmem:[%s0 + $0x8] sm:$0xff]
    %v24 = vld [vmem:[%s1] sm:$0xf]
    %v25 = vld [vmem:[%s1 + $0x4] sm:$0xf]
    %v26 = vld [vmem:[%s1 + $0x8] sm:$0xf]
    %v27 = vld [vmem:[%s1 + $0xc] sm:$0xf]
    %v28 = vld [vmem:[%s1 + $0x10] sm:$0xf]
    %v29 = vld [vmem:[%s1 + $0x14] sm:$0xf]
    %v30 = vld [vmem:[%s1 + $0x18] sm:$0xf]
    %v31 = vld [vmem:[%s1 + $0x1c] sm:$0xf]
    %v32 = vld [vmem:[%s1 + $0x20] sm:$0xf]
    %v33 = vld [vmem:[%s1 + $0x24] sm:$0xf]
    %v34 = vld [vmem:[%s1 + $0x28] sm:$0xf]
    %v35 = vld [vmem:[%s1 + $0x2c] sm:$0xf]
    %v36 = vld [vmem:[%s1 + $0x30] sm:$0xf]
    %v37 = vld [vmem:[%s1 + $0x34] sm:$0xf]
    %v38 = vld [vmem:[%s1 + $0x38] sm:$0xf]
    %v39 = vld [vmem:[%s1 + $0x3c] sm:$0xf]
    %v40 = vld [vmem:[%s1 + $0x40] sm:$0xf]
    %v41 = vld [vmem:[%s1 + $0x44] sm:$0xf]
    %v42 = vld [vmem:[%s1 + $0x48] sm:$0xf]
    %v43 = vld [vmem:[%s1 + $0x4c] sm:$0xf]
    %v44 = vld [vmem:[%s1 + $0x50] sm:$0xf]
    %v45 = vld [vmem:[%s1 + $0x54] sm:$0xf]
    %v46 = vld [vmem:[%s1 + $0x58] sm:$0xf]
    %v47 = vld [vmem:[%s1 + $0x5c] sm:$0xf]
    %v50 = vunpack.c.l.b16 %v22
    %v51 = vunpack.c.h.b16 %v22
    %v52 = vunpack.c.l.b16 %v23
    %v53 = vunpack.c.h.b16 %v23
    %v54 = vpack.c.b16 %v52, %v50
    %v55 = vpack.c.b16 %v53, %v51
    %v81 = vunpack.c.l.b16 %v24
    %v82 = vunpack.c.l.b16 %v25
    %v83 = vunpack.c.l.b16 %v26
    %v84 = vunpack.c.l.b16 %v27
    %v85 = vunpack.c.l.b16 %v28
    %v86 = vunpack.c.l.b16 %v29
    %v87 = vunpack.c.l.b16 %v30
    %v88 = vunpack.c.l.b16 %v31
    %v89 = vunpack.c.l.b16 %v32
    %v90 = vunpack.c.l.b16 %v33
    %v91 = vunpack.c.l.b16 %v34
    %v92 = vunpack.c.l.b16 %v35
    %v93 = vunpack.c.l.b16 %v36
    %v94 = vunpack.c.l.b16 %v37
    %v95 = vunpack.c.l.b16 %v38
    %v96 = vunpack.c.l.b16 %v39
    %v97 = vunpack.c.l.b16 %v40
    %v98 = vunpack.c.l.b16 %v41
    %v99 = vunpack.c.l.b16 %v42
    %v100 = vunpack.c.l.b16 %v43
    %v101 = vunpack.c.l.b16 %v44
    %v102 = vunpack.c.l.b16 %v45
    %v103 = vunpack.c.l.b16 %v46
    %v104 = vunpack.c.l.b16 %v47
    %v105 = vpack.c.b16 %v82, %v81
    %v106 = vpack.c.b16 %v84, %v83
    %v107 = vpack.c.b16 %v86, %v85
    %v108 = vpack.c.b16 %v88, %v87
    %v109 = vpack.c.b16 %v90, %v89
    %v110 = vpack.c.b16 %v92, %v91
    %v111 = vpack.c.b16 %v94, %v93
    %v112 = vpack.c.b16 %v96, %v95
    %v113 = vpack.c.b16 %v98, %v97
    %v114 = vpack.c.b16 %v100, %v99
    %v115 = vpack.c.b16 %v102, %v101
    %v116 = vpack.c.b16 %v104, %v103
    %vm129 = vcmask 523264
    %v131 = vsel %vm129, %v55, 0
    %133 = vmatprep.subr.bf16.mxu0 0
    %134 = vmatpush1.bf16.msra.mxu0 %v112
    %135 = vmatprep.subr.bf16.mxu0 0
    %136 = vmatpush1.bf16.msra.mxu0 %v111
    %137 = vmatprep.subr.bf16.mxu0 0
    %138 = vmatpush1.bf16.msra.mxu0 %v110
    %139 = vmatprep.subr.bf16.mxu0 0
    %140 = vmatpush1.bf16.msra.mxu0 %v109
    %141 = vmatprep.subr.bf16.mxu0 0
    %142 = vmatpush1.bf16.msra.mxu0 %v108
    %143 = vmatprep.subr.bf16.mxu0 0
    %144 = vmatpush1.bf16.msra.mxu0 %v107
    %145 = vmatprep.subr.bf16.mxu0 0
    %146 = vmatpush1.bf16.msra.mxu0 %v106
    %147 = vmatprep.subr.bf16.mxu0 0
    %148 = vmatpush1.bf16.msra.mxu0 %v105
    %149 = vmatprep.subr.bf16.mxu0 0
    %150 = vmatpush2.bf16.msra.mxu0 0
    %151 = vmatprep.subr.bf16.mxu0 0
    %152 = vmatpush2.bf16.msra.mxu0 0
    %153 = vmatprep.subr.bf16.mxu0 0
    %154 = vmatpush2.bf16.msra.mxu0 0
    %155 = vmatprep.subr.bf16.mxu0 0
    %156 = vmatpush2.bf16.msra.mxu0 0
    %157 = vmatprep.subr.bf16.mxu0 0
    %158 = vmatpush2.bf16.msra.mxu0 %v116
    %159 = vmatprep.subr.bf16.mxu0 0
    %160 = vmatpush2.bf16.msra.mxu0 %v115
    %161 = vmatprep.subr.bf16.mxu0 0
    %162 = vmatpush2.bf16.msra.mxu0 %v114
    %163 = vmatprep.subr.bf16.mxu0 0
    %164 = vmatpush2.bf16.msra.mxu0 %v113
    %165 = vmatprep.mubr.bf16.mxu0 %v131
    %166 = vmatmul.mubr.bf16.gmra.mxu0 %v54
    %v167 = vpop.f32.mrf.mxu0
    %v168 = vadd.f32 0.0, %v167
    %v169 = vpop.f32.mrf.mxu0
    %v170 = vpop.f32.mrf.mxu0
    %v171 = vadd.f32 0.0, %v170
    %v172 = vpop.f32.mrf.mxu0
    %173 = vdwg.mxu0
    %v174 = vld [vmem:[%s2] sm:$0xff]
    %v175 = vadd.f32 %v168, %v174
    %v176 = vadd.f32 %v171, %v174
    %v177 = vsel %vm129, %v175, 0.0
    %178 = vadd.xlane.f32.xlu0 %v177
    %v179 = vpop.xlane.xlu0 %178
    %v180 = vsel %vm129, %v176, 0.0
    %181 = vadd.xlane.f32.xlu0 %v180
    %v182 = vpop.xlane.xlu0 %181
    %v183 = vrcp.pop 64.0
    %v184 = vmul.f32 %v179, %v183
    %v185 = vmul.f32 %v182, %v183
    %v186 = vsub.f32 %v175, %v184
    %v187 = vsub.f32 %v176, %v185
    %v188 = vmul.f32 %v186, %v186
    %v189 = vmul.f32 %v187, %v187
    %v190 = vsel %vm129, %v188, 0.0
    %191 = vadd.xlane.f32.xlu0 %v190
    %v192 = vpop.xlane.xlu0 %191
    %v193 = vsel %vm129, %v189, 0.0
    %194 = vadd.xlane.f32.xlu0 %v193
    %v195 = vpop.xlane.xlu0 %194
    %v196 = vmul.f32 %v192, %v183
    %v197 = vmul.f32 %v195, %v183
    %v198 = vadd.f32 %v196, 1e-05
    %v199 = vadd.f32 %v197, 1e-05
    %v200 = vrsqrt.pop %v198
    %v201 = vrsqrt.pop %v199
    %v202 = vmul.f32 %v186, %v200
    %v203 = vmul.f32 %v187, %v201
    %v204 = vld [vmem:[%s3] sm:$0x1]
    %v206 = vlaneseq
    %v207 = vshrl.u32 %v206, 7
    %v208 = vsub.s32 0, %v207
    %v209 = vrot.slane %v204, %v208
    %v211 = vmul.f32 %v202, %v209
    %v212 = vmul.f32 %v203, %v209
    %v213 = vld [vmem:[%s4] sm:$0x1]
    %v215 = vlaneseq
    %v216 = vshrl.u32 %v215, 7
    %v217 = vsub.s32 0, %v216
    %v218 = vrot.slane %v213, %v217
    %v220 = vadd.f32 %v211, %v218
    %v221 = vadd.f32 %v212, %v218
    %222 = vst.msk [vmem:[#allocation2] sm:$0xff] %vm129, %v220
    %223 = vst.msk [vmem:[#allocation2 + $0x8] sm:$0xff] %vm129, %v221
    // Predicated region
    $region22: #{tpu_custom_call.1} parent=1 // pred_check
      _
    $region23: #{tpu_custom_call.1} parent=1 // pred_check_branch
      %225 = sbr.rel (0) target = $region25
    $region24: #{tpu_custom_call.1} parent=1 // pred_region
      %s227 = ssub.s32 256, 256
      %228 = vsyncadd [#allocation3], %s227
      %s229 = sshll.u32 [#allocation2], 4
      %s230 = int_to_ptr.vmem [resolvable:$true] %s229
      %235 = dma.vmem_to_hbm [thread:$0]  %s230, 256, %s5, [#allocation3], 128, 128, 8
    $region25: #{tpu_custom_call.1} parent=1 // pred_fallthru
      _
    // Predicated region
    $region26: #{tpu_custom_call.1} parent=1 // pred_check
      _
    $region27: #{tpu_custom_call.1} parent=1 // pred_check_branch
      %237 = sbr.rel (0) target = $region29
    $region28: #{tpu_custom_call.1} parent=1 // pred_region
      %238 = dma.done [#allocation3], 256
    $region29: #{tpu_custom_call.1} parent=1 // pred_fallthru
      _
    %239 = vsyncpa [#allocation3], 1

</llo_original>
